<compile_context>
chip_gen: v5e
topology: v5e:2x2
jax: 0.10.0
libtpu: 0.0.40
codegen_flags: <defaults>
</compile_context>

<pallas_src>
import functools

import jax
import jax.numpy as jnp
from jax import lax
from jax.experimental import pallas as pl
from jax.experimental.pallas import tpu as pltpu

_LOG2E = 1.4426950408889634


# ----------------------------- helpers --------------------------------------
def _layernorm_f32(v, g_row, b_row, eps=1e-5):
    # v: (rows, C) f32, g_row/b_row: (1, C) f32.  PyTorch LayerNorm semantics.
    mu = jnp.mean(v, axis=-1, keepdims=True)
    var = jnp.mean((v - mu) ** 2, axis=-1, keepdims=True)
    return (v - mu) * lax.rsqrt(var + eps) * g_row + b_row


def _gelu_exact(x):
    # PyTorch nn.GELU() default (erf-based, exact).
    return 0.5 * x * (1.0 + lax.erf(x * jnp.float32(0.7071067811865476)))


def _round_up(x, m):
    return ((x + m - 1) // m) * m


def _choose_row_tiling(n):
    # Pad tokens to an (8,128)-friendly count, then pick the largest row tile
    # (up to 512 -> amortizes per-grid-step overhead on v5e/v6e, still VMEM-safe).
    n_pad = _round_up(n, 128) if n >= 128 else _round_up(n, 8)
    for t in (512, 256, 128, 64, 32, 16, 8):
        if n_pad % t == 0:
            return n_pad, t
    return n_pad, n_pad


def _attn_q_tile(n_pad):
    for t in (256, 128):
        if n_pad % t == 0:
            return t
    return n_pad


def _vmem_limit_bytes():
    # Generation aware: ~75% of physical VMEM (48 MiB on 64-MiB v7x,
    # 96 MiB on 128-MiB v5e/v6e), capped well below 128 MiB.
    try:
        cap = pltpu.get_tpu_info().vmem_capacity_bytes
    except Exception:
        cap = 64 * 1024 * 1024
    return int(min(cap * 3 // 4, 112 * 1024 * 1024))


def _const_spec(shape, single_buffer=True):
    # Weights / LN params: constant index map -> keep a single resident copy
    # instead of the default 2-deep buffering (halves resident weight VMEM).
    idx = lambda *_: (0,) * len(shape)
    if single_buffer:
        try:
            return pl.BlockSpec(shape, idx, pipeline_mode=pl.Buffered(1))
        except TypeError:  # older jax without pipeline_mode kwarg
            pass
    return pl.BlockSpec(shape, idx)


# ---------------------- pass 1: LN1 + QKV projection -------------------------
def ln_qkv_kernel(x_ref, g_ref, b_ref, w_ref, bias_ref, q_ref, k_ref, v_ref,
                  *, q_scale):
    x = x_ref[0].astype(jnp.float32)                           # (tN, C)
    C = x.shape[-1]
    h = _layernorm_f32(x, g_ref[...], b_ref[...])
    qkv = jnp.dot(h.astype(jnp.bfloat16), w_ref[...],
                  preferred_element_type=jnp.float32) + bias_ref[...]   # (tN, 3C)
    # softmax scale * log2(e) folded into q -> attention kernel uses exp2.
    q_ref[0] = (qkv[:, 0:C] * q_scale).astype(q_ref.dtype)
    k_ref[0] = qkv[:, C:2 * C].astype(k_ref.dtype)
    v_ref[0] = qkv[:, 2 * C:3 * C].astype(v_ref.dtype)


# ----------------- pass 2: per-(batch, head, q-tile) attention ---------------
def attn_head_kernel(q_ref, k_ref, v_ref, o_ref, *, n_real):
    q = q_ref[0, 0]                                            # (tQ, D) bf16, pre-scaled
    k = k_ref[0, 0]                                            # (Np, D) bf16
    v = v_ref[0, 0]                                            # (Np, D) bf16
    # contract on D directly, no explicit k transpose
    s = lax.dot_general(q, k, (((1,), (1,)), ((), ())),
                        preferred_element_type=jnp.float32)    # (tQ, Np) f32
    if s.shape[-1] > n_real:                                   # static: mask padded keys
        key_idx = lax.broadcasted_iota(jnp.int32, s.shape, 1)
        s = jnp.where(key_idx < n_real, s, jnp.float32(-1e30))
    s = s - jnp.max(s, axis=-1, keepdims=True)
    p = jnp.exp2(s)                                            # log2e already folded into q
    inv = pl.reciprocal(jnp.sum(p, axis=-1, keepdims=True), approx=True)
    p = (p * inv).astype(jnp.bfloat16)
    o_ref[0, 0] = jnp.dot(p, v, preferred_element_type=jnp.float32).astype(o_ref.dtype)


# ------------- pass 3: proj + residual1 + LN2 + MLP + residual2 --------------
def proj_mlp_kernel(attn_ref, x_ref, projw_ref, projb_ref, ln2g_ref, ln2b_ref,
                    fc1w_ref, fc1b_ref, fc2w_ref, fc2b_ref, o_ref):
    x = x_ref[0].astype(jnp.float32)                           # (tN, C)
    a = jnp.dot(attn_ref[0], projw_ref[...],
                preferred_element_type=jnp.float32) + projb_ref[...]
    x1 = x + a                                                 # residual 1
    h2 = _layernorm_f32(x1, ln2g_ref[...], ln2b_ref[...])
    m = jnp.dot(h2.astype(jnp.bfloat16), fc1w_ref[...],
                preferred_element_type=jnp.float32) + fc1b_ref[...]
    m = _gelu_exact(m)
    m = jnp.dot(m.astype(jnp.bfloat16), fc2w_ref[...],
                preferred_element_type=jnp.float32) + fc2b_ref[...]
    o_ref[0] = (x1 + m).astype(o_ref.dtype)                    # residual 2


# ------------------------------ wrapper --------------------------------------
def transformer_block(x, params, *, num_heads):
    B, N, C = x.shape
    D = C // num_heads
    Hid = params["fc1_w"].shape[1]

    # Weights feed the MXU in bf16; biases / LN params stay f32.
    qkv_w = params["qkv_w"].astype(jnp.bfloat16)
    proj_w = params["proj_w"].astype(jnp.bfloat16)
    fc1_w = params["fc1_w"].astype(jnp.bfloat16)
    fc2_w = params["fc2_w"].astype(jnp.bfloat16)

    vmem_limit = _vmem_limit_bytes()

    Np, tN = _choose_row_tiling(N)
    nt = Np // tN
    x_p = x if Np == N else jnp.pad(x, ((0, 0), (0, Np - N), (0, 0)))

    # ---- pass 1: q,k,v = split(LN1(x) @ Wqkv + b) ---------------------------
    q_scale = float(D ** -0.5 * _LOG2E)
    qkv_cost = pl.CostEstimate(
        flops=int(2 * B * Np * C * 3 * C),
        transcendentals=int(B * Np),
        bytes_accessed=int(B * Np * C * 4 + 3 * B * Np * C * 2
                           + C * 3 * C * 2 + 5 * C * 4))
    q, k, v = pl.pallas_call(
        functools.partial(ln_qkv_kernel, q_scale=q_scale),
        out_shape=tuple(jax.ShapeDtypeStruct((B, Np, C), jnp.bfloat16)
                        for _ in range(3)),
        grid_spec=pltpu.PrefetchScalarGridSpec(
            num_scalar_prefetch=0,
            grid=(B, nt),
            in_specs=[
                pl.BlockSpec((1, tN, C), lambda b, t: (b, t, 0)),   # x
                _const_spec((1, C)), _const_spec((1, C)),           # ln1 gamma, beta
                _const_spec((C, 3 * C)), _const_spec((1, 3 * C)),   # qkv W^T (bf16), b
            ],
            out_specs=[pl.BlockSpec((1, tN, C), lambda b, t: (b, t, 0))] * 3,
        ),
        compiler_params=pltpu.CompilerParams(
            dimension_semantics=("parallel", "parallel"),
            vmem_limit_bytes=vmem_limit),
        cost_estimate=qkv_cost,
    )(x_p, params["ln1_g"], params["ln1_b"], qkv_w, params["qkv_b"])

    # Head-major layout in the wrapper (cheap XLA transpose): attention kernel
    # grids over (B, H, q-tiles) with full-D, full-N blocks.
    to_heads = lambda t: t.reshape(B, Np, num_heads, D).transpose(0, 2, 1, 3)
    q4, k4, v4 = to_heads(q), to_heads(k), to_heads(v)          # (B, H, Np, D)

    # ---- pass 2: attention ---------------------------------------------------
    tQ = _attn_q_tile(Np)
    nq = Np // tQ
    attn_cost = pl.CostEstimate(
        flops=int(4 * B * num_heads * Np * Np * D),
        transcendentals=int(B * num_heads * Np * (Np + 1)),
        bytes_accessed=int(4 * B * num_heads * Np * D * 2))
    attn = pl.pallas_call(
        functools.partial(attn_head_kernel, n_real=N),
        out_shape=jax.ShapeDtypeStruct((B, num_heads, Np, D), jnp.bfloat16),
        grid_spec=pltpu.PrefetchScalarGridSpec(
            num_scalar_prefetch=0,
            grid=(B, num_heads, nq),
            in_specs=[
                pl.BlockSpec((1, 1, tQ, D), lambda b, h, qi: (b, h, qi, 0)),  # q tile
                pl.BlockSpec((1, 1, Np, D), lambda b, h, qi: (b, h, 0, 0)),   # k (full)
                pl.BlockSpec((1, 1, Np, D), lambda b, h, qi: (b, h, 0, 0)),   # v (full)
            ],
            out_specs=pl.BlockSpec((1, 1, tQ, D), lambda b, h, qi: (b, h, qi, 0)),
        ),
        compiler_params=pltpu.CompilerParams(
            dimension_semantics=("parallel", "parallel", "parallel"),
            vmem_limit_bytes=vmem_limit),
        cost_estimate=attn_cost,
    )(q4, k4, v4)

    # back to token-major (B, Np, C) so the fused proj/MLP pass is lane-dense
    attn_tok = attn.transpose(0, 2, 1, 3).reshape(B, Np, C)

    # ---- pass 3: out = x1 + MLP(LN2(x1)),  x1 = x + proj(attn)  (fused) -----
    mlp_cost = pl.CostEstimate(
        flops=int(2 * B * Np * C * C + 4 * B * Np * C * Hid),
        transcendentals=int(B * Np * Hid),
        bytes_accessed=int(B * Np * C * (4 + 2 + 4)
                           + (C * C + 2 * C * Hid) * 2 + (Hid + 5 * C) * 4))
    out = pl.pallas_call(
        proj_mlp_kernel,
        out_shape=jax.ShapeDtypeStruct((B, Np, C), x.dtype),
        grid_spec=pltpu.PrefetchScalarGridSpec(
            num_scalar_prefetch=0,
            grid=(B, nt),
            in_specs=[
                pl.BlockSpec((1, tN, C), lambda b, t: (b, t, 0)),   # attn (bf16)
                pl.BlockSpec((1, tN, C), lambda b, t: (b, t, 0)),   # x residual
                _const_spec((C, C)), _const_spec((1, C)),           # proj W^T, b
                _const_spec((1, C)), _const_spec((1, C)),           # ln2 gamma, beta
                _const_spec((C, Hid)), _const_spec((1, Hid)),       # fc1 W^T, b
                _const_spec((Hid, C)), _const_spec((1, C)),         # fc2 W^T, b
            ],
            out_specs=pl.BlockSpec((1, tN, C), lambda b, t: (b, t, 0)),
        ),
        compiler_params=pltpu.CompilerParams(
            dimension_semantics=("parallel", "parallel"),
            vmem_limit_bytes=vmem_limit),
        cost_estimate=mlp_cost,
    )(attn_tok, x_p, proj_w, params["proj_b"], params["ln2_g"], params["ln2_b"],
      fc1_w, params["fc1_b"], fc2_w, params["fc2_b"])

    return out if Np == N else out[:, :N, :]


# ---------------- pure-JAX f32 reference (for correctness check) -------------
def reference_block(x, p, *, num_heads):
    B, N, C = x.shape
    D = C // num_heads

    def ln(v, g, b):
        mu = jnp.mean(v, -1, keepdims=True)
        var = jnp.mean((v - mu) ** 2, -1, keepdims=True)
        return (v - mu) / jnp.sqrt(var + 1e-5) * g + b

    h = ln(x, p["ln1_g"], p["ln1_b"])
    qkv = h @ p["qkv_w"] + p["qkv_b"]                       # (B, N, 3C)
    qkv = qkv.reshape(B, N, 3, num_heads, D).transpose(2, 0, 3, 1, 4)
    q, k, v = qkv[0], qkv[1], qkv[2]                        # (B, H, N, D)
    attn = (q @ k.transpose(0, 1, 3, 2)) * D ** -0.5
    attn = jax.nn.softmax(attn, axis=-1)
    o = (attn @ v).transpose(0, 2, 1, 3).reshape(B, N, C)
    o = o @ p["proj_w"] + p["proj_b"]
    x = x + o
    h2 = ln(x, p["ln2_g"], p["ln2_b"])
    m = h2 @ p["fc1_w"] + p["fc1_b"]
    m = jax.nn.gelu(m, approximate=False)
    m = m @ p["fc2_w"] + p["fc2_b"]
    return x + m


if __name__ == "__main__":
    B, N, C = 2, 8, 32
    num_heads = 4
    mlp_ratio = 4.0
    Hid = int(C * mlp_ratio)

    key = jax.random.PRNGKey(0)
    ks = jax.random.split(key, 9)

    # Deterministic synthetic parameters (Linear weights stored transposed: (in, out)).
    params = {
        "ln1_g": jnp.ones((1, C), jnp.float32),
        "ln1_b": jnp.zeros((1, C), jnp.float32),
        "qkv_w": 0.02 * jax.random.normal(ks[0], (C, 3 * C), jnp.float32),
        "qkv_b": 0.01 * jax.random.normal(ks[1], (1, 3 * C), jnp.float32),
        "proj_w": 0.02 * jax.random.normal(ks[2], (C, C), jnp.float32),
        "proj_b": 0.01 * jax.random.normal(ks[3], (1, C), jnp.float32),
        "ln2_g": jnp.ones((1, C), jnp.float32),
        "ln2_b": jnp.zeros((1, C), jnp.float32),
        "fc1_w": 0.02 * jax.random.normal(ks[4], (C, Hid), jnp.float32),
        "fc1_b": 0.01 * jax.random.normal(ks[5], (1, Hid), jnp.float32),
        "fc2_w": 0.02 * jax.random.normal(ks[6], (Hid, C), jnp.float32),
        "fc2_b": 0.01 * jax.random.normal(ks[7], (1, C), jnp.float32),
    }

    x = jax.random.normal(ks[8], (B, N, C), jnp.float32)

    out = jax.block_until_ready(transformer_block(x, params, num_heads=num_heads))
    ref = reference_block(x, params, num_heads=num_heads)

    assert out.shape == (B, N, C)
    # bf16 MXU operands + approx reciprocal => small drift vs the f32 reference.
    err = jnp.max(jnp.abs(out - ref))
    assert jnp.allclose(out, ref, atol=3e-2, rtol=3e-2), f"max abs err {err}"

    print("KERNEL_OK")
</pallas_src>

<mosaic_0001>
module attributes {stable_mosaic.version = 11 : i64} {
  func.func @ln_qkv_kernel(%arg0: i32, %arg1: i32, %arg2: memref<1x8x32xf32, #tpu.memory_space<vmem>>, %arg3: memref<1x32xf32, #tpu.memory_space<vmem>>, %arg4: memref<1x32xf32, #tpu.memory_space<vmem>>, %arg5: memref<32x96xbf16, #tpu.memory_space<vmem>>, %arg6: memref<1x96xf32, #tpu.memory_space<vmem>>, %arg7: memref<1x8x32xbf16, #tpu.memory_space<vmem>>, %arg8: memref<1x8x32xbf16, #tpu.memory_space<vmem>>, %arg9: memref<1x8x32xbf16, #tpu.memory_space<vmem>>) attributes {dimension_semantics = [#tpu.dimension_semantics<parallel>, #tpu.dimension_semantics<parallel>], iteration_bounds = array<i64: 2, 1>, scalar_prefetch = 0 : i64, scratch_operands = 0 : i64, tpu.core_type = #tpu.core_type<tc>, window_params = [{transform_indices = @transform_0, window_bounds = array<i64: 1, 8, 32>}, {pipeline_mode = #tpu.pipeline_mode<synchronous>, transform_indices = @transform_1, window_bounds = array<i64: 1, 32>}, {pipeline_mode = #tpu.pipeline_mode<synchronous>, transform_indices = @transform_2, window_bounds = array<i64: 1, 32>}, {pipeline_mode = #tpu.pipeline_mode<synchronous>, transform_indices = @transform_3, window_bounds = array<i64: 32, 96>}, {pipeline_mode = #tpu.pipeline_mode<synchronous>, transform_indices = @transform_4, window_bounds = array<i64: 1, 96>}, {transform_indices = @transform_5, window_bounds = array<i64: 1, 8, 32>}, {transform_indices = @transform_6, window_bounds = array<i64: 1, 8, 32>}, {transform_indices = @transform_7, window_bounds = array<i64: 1, 8, 32>}]} {
    %c0 = arith.constant 0 : index
    %c0_0 = arith.constant 0 : index
    %c0_1 = arith.constant 0 : index
    %0 = vector.load %arg2[%c0, %c0_0, %c0_1] : memref<1x8x32xf32, #tpu.memory_space<vmem>>, vector<1x8x32xf32>
    %1 = vector.shape_cast %0 : vector<1x8x32xf32> to vector<8x32xf32>
    %c0_2 = arith.constant 0 : index
    %c0_3 = arith.constant 0 : index
    %2 = vector.load %arg3[%c0_2, %c0_3] : memref<1x32xf32, #tpu.memory_space<vmem>>, vector<1x32xf32>
    %c0_4 = arith.constant 0 : index
    %c0_5 = arith.constant 0 : index
    %3 = vector.load %arg4[%c0_4, %c0_5] : memref<1x32xf32, #tpu.memory_space<vmem>>, vector<1x32xf32>
    %cst = arith.constant dense<0.000000e+00> : vector<8xf32>
    %4 = vector.multi_reduction <add>, %1, %cst [1] : vector<8x32xf32> to vector<8xf32>
    %5 = vector.shape_cast %4 : vector<8xf32> to vector<8x1xf32>
    %cst_6 = arith.constant 3.200000e+01 : f32
    %6 = vector.broadcast %cst_6 : f32 to vector<8x1xf32>
    %7 = arith.divf %5, %6 : vector<8x1xf32>
    %8 = vector.broadcast %7 : vector<8x1xf32> to vector<8x32xf32>
    %9 = arith.subf %1, %8 : vector<8x32xf32>
    %10 = arith.mulf %9, %9 : vector<8x32xf32>
    %cst_7 = arith.constant dense<0.000000e+00> : vector<8xf32>
    %11 = vector.multi_reduction <add>, %10, %cst_7 [1] : vector<8x32xf32> to vector<8xf32>
    %12 = vector.shape_cast %11 : vector<8xf32> to vector<8x1xf32>
    %cst_8 = arith.constant 3.200000e+01 : f32
    %13 = vector.broadcast %cst_8 : f32 to vector<8x1xf32>
    %14 = arith.divf %12, %13 : vector<8x1xf32>
    %15 = vector.broadcast %7 : vector<8x1xf32> to vector<8x32xf32>
    %16 = arith.subf %1, %15 : vector<8x32xf32>
    %cst_9 = arith.constant 9.99999974E-6 : f32
    %17 = vector.broadcast %cst_9 : f32 to vector<8x1xf32>
    %18 = arith.addf %14, %17 : vector<8x1xf32>
    %19 = math.rsqrt %18 : vector<8x1xf32>
    %20 = vector.broadcast %19 : vector<8x1xf32> to vector<8x32xf32>
    %21 = arith.mulf %16, %20 : vector<8x32xf32>
    %22 = vector.broadcast %2 : vector<1x32xf32> to vector<8x32xf32>
    %23 = arith.mulf %21, %22 : vector<8x32xf32>
    %24 = vector.broadcast %3 : vector<1x32xf32> to vector<8x32xf32>
    %25 = arith.addf %23, %24 : vector<8x32xf32>
    %26 = arith.truncf %25 : vector<8x32xf32> to vector<8x32xbf16>
    %c0_10 = arith.constant 0 : index
    %c0_11 = arith.constant 0 : index
    %27 = vector.load %arg5[%c0_10, %c0_11] : memref<32x96xbf16, #tpu.memory_space<vmem>>, vector<32x96xbf16>
    %cst_12 = arith.constant dense<0.000000e+00> : vector<8x96xf32>
    %28 = tpu.matmul %26, %27, %cst_12 {dimension_numbers = #tpu.dot_dimension_numbers<[1], [0], [0], [1], [0, 0, 1, 1], [], []>} : vector<8x32xbf16>, vector<32x96xbf16>, vector<8x96xf32> -> vector<8x96xf32>
    %c0_13 = arith.constant 0 : index
    %c0_14 = arith.constant 0 : index
    %29 = vector.load %arg6[%c0_13, %c0_14] : memref<1x96xf32, #tpu.memory_space<vmem>>, vector<1x96xf32>
    %30 = vector.broadcast %29 : vector<1x96xf32> to vector<8x96xf32>
    %31 = arith.addf %28, %30 : vector<8x96xf32>
    %32 = vector.extract_strided_slice %31 {offsets = [0, 0], sizes = [8, 32], strides = [1, 1]} : vector<8x96xf32> to vector<8x32xf32>
    %cst_15 = arith.constant 0.510069728 : f32
    %33 = vector.broadcast %cst_15 : f32 to vector<8x32xf32>
    %34 = arith.mulf %32, %33 : vector<8x32xf32>
    %35 = arith.truncf %34 : vector<8x32xf32> to vector<8x32xbf16>
    %c0_16 = arith.constant 0 : index
    %c0_17 = arith.constant 0 : index
    %c0_18 = arith.constant 0 : index
    %36 = vector.load %arg7[%c0_16, %c0_17, %c0_18] : memref<1x8x32xbf16, #tpu.memory_space<vmem>>, vector<1x8x32xbf16>
    %37 = vector.shape_cast %36 : vector<1x8x32xbf16> to vector<8x32xbf16>
    %38 = vector.shape_cast %35 : vector<8x32xbf16> to vector<1x8x32xbf16>
    tpu.vector_store %arg7[%c0_16, %c0_17, %c0_18], %38 {strides = array<i32>} : memref<1x8x32xbf16, #tpu.memory_space<vmem>>, vector<1x8x32xbf16>,
    %39 = vector.extract_strided_slice %31 {offsets = [0, 32], sizes = [8, 32], strides = [1, 1]} : vector<8x96xf32> to vector<8x32xf32>
    %40 = arith.truncf %39 : vector<8x32xf32> to vector<8x32xbf16>
    %c0_19 = arith.constant 0 : index
    %c0_20 = arith.constant 0 : index
    %c0_21 = arith.constant 0 : index
    %41 = vector.load %arg8[%c0_19, %c0_20, %c0_21] : memref<1x8x32xbf16, #tpu.memory_space<vmem>>, vector<1x8x32xbf16>
    %42 = vector.shape_cast %41 : vector<1x8x32xbf16> to vector<8x32xbf16>
    %43 = vector.shape_cast %40 : vector<8x32xbf16> to vector<1x8x32xbf16>
    tpu.vector_store %arg8[%c0_19, %c0_20, %c0_21], %43 {strides = array<i32>} : memref<1x8x32xbf16, #tpu.memory_space<vmem>>, vector<1x8x32xbf16>,
    %44 = vector.extract_strided_slice %31 {offsets = [0, 64], sizes = [8, 32], strides = [1, 1]} : vector<8x96xf32> to vector<8x32xf32>
    %45 = arith.truncf %44 : vector<8x32xf32> to vector<8x32xbf16>
    %c0_22 = arith.constant 0 : index
    %c0_23 = arith.constant 0 : index
    %c0_24 = arith.constant 0 : index
    %46 = vector.load %arg9[%c0_22, %c0_23, %c0_24] : memref<1x8x32xbf16, #tpu.memory_space<vmem>>, vector<1x8x32xbf16>
    %47 = vector.shape_cast %46 : vector<1x8x32xbf16> to vector<8x32xbf16>
    %48 = vector.shape_cast %45 : vector<8x32xbf16> to vector<1x8x32xbf16>
    tpu.vector_store %arg9[%c0_22, %c0_23, %c0_24], %48 {strides = array<i32>} : memref<1x8x32xbf16, #tpu.memory_space<vmem>>, vector<1x8x32xbf16>,
    return
  }
  func.func @transform_0(%arg0: i32, %arg1: i32) -> (i32, i32, i32) {
    %c0_i32 = arith.constant 0 : i32
    %c0_i32_0 = arith.constant 0 : i32
    return %arg0, %arg1, %c0_i32 : i32, i32, i32
  }
  func.func @transform_1(%arg0: i32, %arg1: i32) -> (i32, i32) {
    %c0_i32 = arith.constant 0 : i32
    %c0_i32_0 = arith.constant 0 : i32
    %c0_i32_1 = arith.constant 0 : i32
    return %c0_i32, %c0_i32_0 : i32, i32
  }
  func.func @transform_2(%arg0: i32, %arg1: i32) -> (i32, i32) {
    %c0_i32 = arith.constant 0 : i32
    %c0_i32_0 = arith.constant 0 : i32
    %c0_i32_1 = arith.constant 0 : i32
    return %c0_i32, %c0_i32_0 : i32, i32
  }
  func.func @transform_3(%arg0: i32, %arg1: i32) -> (i32, i32) {
    %c0_i32 = arith.constant 0 : i32
    %c0_i32_0 = arith.constant 0 : i32
    %c0_i32_1 = arith.constant 0 : i32
    return %c0_i32, %c0_i32_0 : i32, i32
  }
  func.func @transform_4(%arg0: i32, %arg1: i32) -> (i32, i32) {
    %c0_i32 = arith.constant 0 : i32
    %c0_i32_0 = arith.constant 0 : i32
    %c0_i32_1 = arith.constant 0 : i32
    return %c0_i32, %c0_i32_0 : i32, i32
  }
  func.func @transform_5(%arg0: i32, %arg1: i32) -> (i32, i32, i32) {
    %c0_i32 = arith.constant 0 : i32
    %c0_i32_0 = arith.constant 0 : i32
    return %arg0, %arg1, %c0_i32 : i32, i32, i32
  }
  func.func @transform_6(%arg0: i32, %arg1: i32) -> (i32, i32, i32) {
    %c0_i32 = arith.constant 0 : i32
    %c0_i32_0 = arith.constant 0 : i32
    return %arg0, %arg1, %c0_i32 : i32, i32, i32
  }
  func.func @transform_7(%arg0: i32, %arg1: i32) -> (i32, i32, i32) {
    %c0_i32 = arith.constant 0 : i32
    %c0_i32_0 = arith.constant 0 : i32
    return %arg0, %arg1, %c0_i32 : i32, i32, i32
  }
}

</mosaic_0001>

<llo_original>
// kernel: tpu_custom_call.1
$region0: #{tpu_custom_call.1}
  #allocation0 [shape = 'u32[]', space=smem, size = 0x4, offset = 0x4, fixed_abs, tag = 'smem constant byte address 0x4 - core index']
  #allocation1 [shape = 'u32[72,128]{1,0:T(1,128)}', space=vmem, size = 0x9000, scoped, tag = 'internal scratch']
  %s0 = inlined_call_operand.hbm [shape: f32[2,8,32], index: 0, kind: input, shape index: {}]
  %s1 = inlined_call_operand.hbm [shape: f32[1,32], index: 1, kind: input, shape index: {}]
  %s2 = inlined_call_operand.vmem [shape: f32[1,32], index: 2, kind: input, shape index: {}]
  %s3 = inlined_call_operand.hbm [shape: bf16[32,96], index: 3, kind: input, shape index: {}]
  %s4 = inlined_call_operand.vmem [shape: f32[1,96], index: 4, kind: input, shape index: {}]
  %s5 = inlined_call_operand.hbm [shape: bf16[2,8,32], index: 5, kind: output, shape index: {0}]
  %s6 = inlined_call_operand.hbm [shape: bf16[2,8,32], index: 6, kind: output, shape index: {1}]
  %s7 = inlined_call_operand.hbm [shape: bf16[2,8,32], index: 7, kind: output, shape index: {2}]
  %8 = xla_tuple %s5, %s6, %s7
  %s9 = sld [smem:[#allocation0]]
  $region81: #{tpu_custom_call.1} parent=0
    _
  %s11 = ssub.s32 1, %s9
  %s12 = scalar_select 0, %s11, %s9
  $region1: #{tpu_custom_call.1} parent=0
    #allocation2 [shape = 'u8[8192]{0}', space=vmem, size = 0x2000, scoped, tag = 'input window, operand 0']
    #allocation3 [shape = 's32[2]{0}', space=sflag, size = 0x8, scoped, tag = 'scoped memory for tpu_custom_call.1']
    #allocation4 [shape = 's32[2]{0}', space=sflag, size = 0x8, scoped, tag = 'scoped memory for tpu_custom_call.1']
    #allocation5 [shape = 'u8[512]{0}', space=vmem, size = 0x400, scoped, tag = 'input window, operand 1, single buffered']
    #allocation6 [shape = 's32[1]{0}', space=sflag, size = 0x4, scoped, tag = 'scoped memory for tpu_custom_call.1']
    #allocation7 [shape = 'u8[8192]{0}', space=vmem, size = 0x2000, scoped, tag = 'input window, operand 3, single buffered']
    #allocation8 [shape = 'u8[4096]{0}', space=vmem, size = 0x1000, scoped, tag = 'output window, operand 0']
    #allocation9 [shape = 'u8[4096]{0}', space=vmem, size = 0x1000, scoped, tag = 'output window, operand 1']
    #allocation10 [shape = 's32[2]{0}', space=sflag, size = 0x8, scoped, tag = 'scoped memory for tpu_custom_call.1']
    #allocation11 [shape = 'u8[4096]{0}', space=vmem, size = 0x1000, scoped, tag = 'output window, operand 2']
    %13 = vsyncpa [#allocation3], 0
    %s14 = scalar_lea.sflag [#allocation3], 1
    %15 = vsyncpa %s14, 0
    %16 = vsyncpa [#allocation6], 0
    %17 = vsyncpa [#allocation4], 0
    %s18 = scalar_lea.sflag [#allocation4], 1
    %19 = vsyncpa %s18, 0
    %20 = vsyncpa [#allocation10], 0
    %s21 = scalar_lea.sflag [#allocation10], 1
    %22 = vsyncpa %s21, 0
    loop: start=0, step=1, limit=4
    $region2: #{tpu_custom_call.1} parent=1 // loop_pre_header
      _
    $region3: #{tpu_custom_call.1} parent=1 // loop_header
      %s24 = sphi 0, %s28
      %p25 = scmp.ge.s32.totalorder %s24, 4
      %s31 = sphi 0, %s43
      %s32 = sphi 0, %s39
      %s33 = sphi 0, %s31
      %s34 = sphi 0, %s32
      %s35 = sphi 0, %s33
      %s36 = sphi 0, %s34
      %s48 = sphi 0, %s50
      %s51 = sphi 0, %s48
      %s52 = sphi 0, %s51
      %s68 = sphi 0, %s52
      %s72 = sphi 0, %s72
      %s74 = sphi 0, %s72
      %s75 = sphi 0, %s74
      %s89 = sphi 0, %s75
      %s93 = sphi 0, %s93
      %s95 = sphi 0, %s93
      %s96 = sphi 0, %s95
      %s110 = sphi 0, %s96
      %s114 = sphi 0, %s114
      %s116 = sphi 0, %s114
      %s117 = sphi 0, %s116
      %s131 = sphi 0, %s117
      %s135 = sphi 0, %s135
      %s137 = sphi 0, %s135
      %s138 = sphi 0, %s137
      %s152 = sphi 0, %s138
      %s160 = sphi 0, %s162
      %s163 = sphi 0, %s160
      %s164 = sphi 0, %s163
      %s180 = sphi 0, %s164
      %s188 = sphi 0, %s190
      %s191 = sphi 0, %s188
      %s192 = sphi 0, %s191
      %s208 = sphi 0, %s192
      %s216 = sphi 0, %s218
      %s219 = sphi 0, %s216
      %s220 = sphi 0, %s219
      %s236 = sphi 0, %s220
    $region4: #{tpu_custom_call.1} parent=1 // loop_header_branch
      %27 = sbr.rel (%p25) target = $region8
    $region5: #{tpu_custom_call.1} parent=1 // loop_body
      %s29 = ssub.s32 %s24, 1
      %s30 = ssub.s32 %s24, 2
      %s37 = sadd.s32 1, %s32
      %p38 = scmp.ge.s32.totalorder %s37, 1
      %s39 = scalar_select %p38, 0, %s37
      %s40 = sadd.s32 1, %s31
      %s41 = scalar_select %p38, %s40, %s31
      %p42 = scmp.ge.s32.totalorder %s41, 2
      %s43 = scalar_select %p42, 0, %s41
      %s44 = ssub.s32 %s31, %s43
      %s45 = ssub.s32 %s32, %s39
      %s46 = sor.u32 %s44, %s45
      %p47 = scmp.eq.s32.totalorder %s46, 0
      %s49 = sadd.s32 %s48, 1
      %s50 = scalar_select %p47, %s48, %s49
      %p53 = pneg %p47
      %p54 = scmp.eq.s32.totalorder %s24, 1
      %p55 = por %p53, %p54
      %p56 = scmp.ne.s32.totalorder %s48, %s51
      %p57 = scmp.eq.s32.totalorder %s24, 0
      %p58 = por %p56, %p57
      %p59 = scmp.ne.s32.totalorder %s48, %s51
      %p60 = scmp.eq.s32.totalorder %s29, 1
      %p61 = por %p59, %p60
      %p62 = scmp.ne.s32.totalorder %s51, %s52
      %p63 = scmp.eq.s32.totalorder %s29, 0
      %p64 = por %p62, %p63
      %p65 = scmp.ne.s32.totalorder %s51, %s52
      %p66 = scmp.eq.s32.totalorder %s30, 1
      %p67 = por %p65, %p66
      %p69 = scmp.ne.s32.totalorder %s52, %s68
      %p70 = scmp.eq.s32.totalorder %s30, 0
      %p71 = por %p69, %p70
      %s73 = sadd.s32 %s72, 1
      %p76 = scmp.eq.s32.totalorder %s24, 1
      %p77 = scmp.ne.s32.totalorder %s72, %s74
      %p78 = scmp.eq.s32.totalorder %s24, 0
      %p79 = por %p77, %p78
      %p80 = scmp.ne.s32.totalorder %s72, %s74
      %p81 = scmp.eq.s32.totalorder %s29, 1
      %p82 = por %p80, %p81
      %p83 = scmp.ne.s32.totalorder %s74, %s75
      %p84 = scmp.eq.s32.totalorder %s29, 0
      %p85 = por %p83, %p84
      %p86 = scmp.ne.s32.totalorder %s74, %s75
      %p87 = scmp.eq.s32.totalorder %s30, 1
      %p88 = por %p86, %p87
      %p90 = scmp.ne.s32.totalorder %s75, %s89
      %p91 = scmp.eq.s32.totalorder %s30, 0
      %p92 = por %p90, %p91
      %s94 = sadd.s32 %s93, 1
      %p97 = scmp.eq.s32.totalorder %s24, 1
      %p98 = scmp.ne.s32.totalorder %s93, %s95
      %p99 = scmp.eq.s32.totalorder %s24, 0
      %p100 = por %p98, %p99
      %p101 = scmp.ne.s32.totalorder %s93, %s95
      %p102 = scmp.eq.s32.totalorder %s29, 1
      %p103 = por %p101, %p102
      %p104 = scmp.ne.s32.totalorder %s95, %s96
      %p105 = scmp.eq.s32.totalorder %s29, 0
      %p106 = por %p104, %p105
      %p107 = scmp.ne.s32.totalorder %s95, %s96
      %p108 = scmp.eq.s32.totalorder %s30, 1
      %p109 = por %p107, %p108
      %p111 = scmp.ne.s32.totalorder %s96, %s110
      %p112 = scmp.eq.s32.totalorder %s30, 0
      %p113 = por %p111, %p112
      %s115 = sadd.s32 %s114, 1
      %p118 = scmp.eq.s32.totalorder %s24, 1
      %p119 = scmp.ne.s32.totalorder %s114, %s116
      %p120 = scmp.eq.s32.totalorder %s24, 0
      %p121 = por %p119, %p120
      %p122 = scmp.ne.s32.totalorder %s114, %s116
      %p123 = scmp.eq.s32.totalorder %s29, 1
      %p124 = por %p122, %p123
      %p125 = scmp.ne.s32.totalorder %s116, %s117
      %p126 = scmp.eq.s32.totalorder %s29, 0
      %p127 = por %p125, %p126
      %p128 = scmp.ne.s32.totalorder %s116, %s117
      %p129 = scmp.eq.s32.totalorder %s30, 1
      %p130 = por %p128, %p129
      %p132 = scmp.ne.s32.totalorder %s117, %s131
      %p133 = scmp.eq.s32.totalorder %s30, 0
      %p134 = por %p132, %p133
      %s136 = sadd.s32 %s135, 1
      %p139 = scmp.eq.s32.totalorder %s24, 1
      %p140 = scmp.ne.s32.totalorder %s135, %s137
      %p141 = scmp.eq.s32.totalorder %s24, 0
      %p142 = por %p140, %p141
      %p143 = scmp.ne.s32.totalorder %s135, %s137
      %p144 = scmp.eq.s32.totalorder %s29, 1
      %p145 = por %p143, %p144
      %p146 = scmp.ne.s32.totalorder %s137, %s138
      %p147 = scmp.eq.s32.totalorder %s29, 0
      %p148 = por %p146, %p147
      %p149 = scmp.ne.s32.totalorder %s137, %s138
      %p150 = scmp.eq.s32.totalorder %s30, 1
      %p151 = por %p149, %p150
      %p153 = scmp.ne.s32.totalorder %s138, %s152
      %p154 = scmp.eq.s32.totalorder %s30, 0
      %p155 = por %p153, %p154
      %s156 = ssub.s32 %s31, %s43
      %s157 = ssub.s32 %s32, %s39
      %s158 = sor.u32 %s156, %s157
      %p159 = scmp.eq.s32.totalorder %s158, 0
      %s161 = sadd.s32 %s160, 1
      %s162 = scalar_select %p159, %s160, %s161
      %p165 = pneg %p159
      %p166 = scmp.eq.s32.totalorder %s24, 1
      %p167 = por %p165, %p166
      %p168 = scmp.ne.s32.totalorder %s160, %s163
      %p169 = scmp.eq.s32.totalorder %s24, 0
      %p170 = por %p168, %p169
      %p171 = scmp.ne.s32.totalorder %s160, %s163
      %p172 = scmp.eq.s32.totalorder %s29, 1
      %p173 = por %p171, %p172
      %p174 = scmp.ne.s32.totalorder %s163, %s164
      %p175 = scmp.eq.s32.totalorder %s29, 0
      %p176 = por %p174, %p175
      %p177 = scmp.ne.s32.totalorder %s163, %s164
      %p178 = scmp.eq.s32.totalorder %s30, 1
      %p179 = por %p177, %p178
      %p181 = scmp.ne.s32.totalorder %s164, %s180
      %p182 = scmp.eq.s32.totalorder %s30, 0
      %p183 = por %p181, %p182
      %s184 = ssub.s32 %s31, %s43
      %s185 = ssub.s32 %s32, %s39
      %s186 = sor.u32 %s184, %s185
      %p187 = scmp.eq.s32.totalorder %s186, 0
      %s189 = sadd.s32 %s188, 1
      %s190 = scalar_select %p187, %s188, %s189
      %p193 = pneg %p187
      %p194 = scmp.eq.s32.totalorder %s24, 1
      %p195 = por %p193, %p194
      %p196 = scmp.ne.s32.totalorder %s188, %s191
      %p197 = scmp.eq.s32.totalorder %s24, 0
      %p198 = por %p196, %p197
      %p199 = scmp.ne.s32.totalorder %s188, %s191
      %p200 = scmp.eq.s32.totalorder %s29, 1
      %p201 = por %p199, %p200
      %p202 = scmp.ne.s32.totalorder %s191, %s192
      %p203 = scmp.eq.s32.totalorder %s29, 0
      %p204 = por %p202, %p203
      %p205 = scmp.ne.s32.totalorder %s191, %s192
      %p206 = scmp.eq.s32.totalorder %s30, 1
      %p207 = por %p205, %p206
      %p209 = scmp.ne.s32.totalorder %s192, %s208
      %p210 = scmp.eq.s32.totalorder %s30, 0
      %p211 = por %p209, %p210
      %s212 = ssub.s32 %s31, %s43
      %s213 = ssub.s32 %s32, %s39
      %s214 = sor.u32 %s212, %s213
      %p215 = scmp.eq.s32.totalorder %s214, 0
      %s217 = sadd.s32 %s216, 1
      %s218 = scalar_select %p215, %s216, %s217
      %p221 = pneg %p215
      %p222 = scmp.eq.s32.totalorder %s24, 1
      %p223 = por %p221, %p222
      %p224 = scmp.ne.s32.totalorder %s216, %s219
      %p225 = scmp.eq.s32.totalorder %s24, 0
      %p226 = por %p224, %p225
      %p227 = scmp.ne.s32.totalorder %s216, %s219
      %p228 = scmp.eq.s32.totalorder %s29, 1
      %p229 = por %p227, %p228
      %p230 = scmp.ne.s32.totalorder %s219, %s220
      %p231 = scmp.eq.s32.totalorder %s29, 0
      %p232 = por %p230, %p231
      %p233 = scmp.ne.s32.totalorder %s219, %s220
      %p234 = scmp.eq.s32.totalorder %s30, 1
      %p235 = por %p233, %p234
      %p237 = scmp.ne.s32.totalorder %s220, %s236
      %p238 = scmp.eq.s32.totalorder %s30, 0
      %p239 = por %p237, %p238
      %p240 = scmp.le.s32.totalorder 1, %s24
      %p241 = scmp.lt.s32.totalorder %s24, 3
      %p242 = pnand %p240, %p241
      %p243 = pneg %p242
      // Predicated region
      $region9: #{tpu_custom_call.1} parent=5 // pred_check
        _
      $region10: #{tpu_custom_call.1} parent=5 // pred_check_branch
        %245 = sbr.rel (%p242) target = $region12
      $region11: #{tpu_custom_call.1} parent=5 // pred_region
        %s246 = ssub.s32 %s24, 1
        // Predicated region
        $region13: #{tpu_custom_call.1} parent=11 // pred_check
          %p247 = pneg %p85
        $region14: #{tpu_custom_call.1} parent=11 // pred_check_branch
          %249 = sbr.rel (%p247) target = $region16
        $region15: #{tpu_custom_call.1} parent=11 // pred_region
          %251 = vsyncadd [#allocation6], 0
          %s253 = sshll.u32 %s1, 4
          %s254 = int_to_ptr.hbm [resolvable:$true] %s253
          %s255 = sshll.u32 [#allocation5], 4
          %s256 = int_to_ptr.vmem [resolvable:$true] %s255
          %258 = dma.hbm_to_vmem [thread:$0]  %s254, 16, %s256, [#allocation6]
        $region16: #{tpu_custom_call.1} parent=11 // pred_fallthru
          _
        // Predicated region
        $region17: #{tpu_custom_call.1} parent=11 // pred_check
          %p259 = pneg %p106
        $region18: #{tpu_custom_call.1} parent=11 // pred_check_branch
          %261 = sbr.rel (%p259) target = $region20
        $region19: #{tpu_custom_call.1} parent=11 // pred_region
          _
        $region20: #{tpu_custom_call.1} parent=11 // pred_fallthru
          _
        // Predicated region
        $region21: #{tpu_custom_call.1} parent=11 // pred_check
          %p262 = pneg %p127
        $region22: #{tpu_custom_call.1} parent=11 // pred_check_branch
          %264 = sbr.rel (%p262) target = $region24
        $region23: #{tpu_custom_call.1} parent=11 // pred_region
          %266 = vsyncadd [#allocation6], 0
          %s267 = sshll.u32 %s3, 4
          %s268 = int_to_ptr.hbm [resolvable:$true] %s267
          %s269 = sshll.u32 [#allocation7], 4
          %s270 = int_to_ptr.vmem [resolvable:$true] %s269
          %275 = dma.hbm_to_vmem [thread:$0]  %s268, 256, %s270, [#allocation6], 64, 64, 4
        $region24: #{tpu_custom_call.1} parent=11 // pred_fallthru
          _
        // Predicated region
        $region25: #{tpu_custom_call.1} parent=11 // pred_check
          %p276 = pneg %p148
        $region26: #{tpu_custom_call.1} parent=11 // pred_check_branch
          %278 = sbr.rel (%p276) target = $region28
        $region27: #{tpu_custom_call.1} parent=11 // pred_region
          _
        $region28: #{tpu_custom_call.1} parent=11 // pred_fallthru
          _
      $region12: #{tpu_custom_call.1} parent=5 // pred_fallthru
        _
      %p279 = scmp.lt.s32.totalorder %s24, 2
      // Predicated region
      $region29: #{tpu_custom_call.1} parent=5 // pred_check
        %p280 = pneg %p279
      $region30: #{tpu_custom_call.1} parent=5 // pred_check_branch
        %282 = sbr.rel (%p280) target = $region32
      $region31: #{tpu_custom_call.1} parent=5 // pred_region
        // Predicated region
        $region33: #{tpu_custom_call.1} parent=31 // pred_check
          %p283 = pneg %p58
        $region34: #{tpu_custom_call.1} parent=31 // pred_check_branch
          %285 = sbr.rel (%p283) target = $region36
        $region35: #{tpu_custom_call.1} parent=31 // pred_region
          %s286 = sand.u32 %s48, 1
          %s287 = scalar_lea.sflag [#allocation3], %s286
          %s288 = sand.u32 %s48, 1
          %s289 = smul.addr %s288, 8
          %s290 = scalar_lea.vmem [#allocation2], %s289
          %292 = vsyncadd %s287, 0
          %s293 = sadd.s32 %s32, %s31
          %s294 = smul.addr %s293, 8
          %s295 = scalar_lea.hbm %s0, %s294
          %s297 = sshll.u32 %s295, 4
          %s298 = int_to_ptr.hbm [resolvable:$true] %s297
          %s299 = sshll.u32 %s290, 4
          %s300 = int_to_ptr.vmem [resolvable:$true] %s299
          %302 = dma.hbm_to_vmem [thread:$0]  %s298, 128, %s300, %s287
        $region36: #{tpu_custom_call.1} parent=31 // pred_fallthru
          _
      $region32: #{tpu_custom_call.1} parent=5 // pred_fallthru
        _
      %p303 = scmp.le.s32.totalorder 1, %s24
      %p304 = scmp.lt.s32.totalorder %s24, 3
      %p305 = pnand %p303, %p304
      %p306 = pneg %p305
      // Predicated region
      $region37: #{tpu_custom_call.1} parent=5 // pred_check
        _
      $region38: #{tpu_custom_call.1} parent=5 // pred_check_branch
        %308 = sbr.rel (%p305) target = $region40
      $region39: #{tpu_custom_call.1} parent=5 // pred_region
        %s309 = ssub.s32 %s24, 1
        %s310 = sand.u32 %s51, 1
        %s311 = scalar_lea.sflag [#allocation3], %s310
        %s312 = sand.u32 %s51, 1
        %s313 = smul.addr %s312, 8
        %s314 = scalar_lea.vmem [#allocation2], %s313
        // Predicated region
        $region41: #{tpu_custom_call.1} parent=39 // pred_check
          %p315 = pneg %p64
        $region42: #{tpu_custom_call.1} parent=39 // pred_check_branch
          %317 = sbr.rel (%p315) target = $region44
        $region43: #{tpu_custom_call.1} parent=39 // pred_region
          %319 = dma.done %s311, 128
        $region44: #{tpu_custom_call.1} parent=39 // pred_fallthru
          _
        // Predicated region
        $region45: #{tpu_custom_call.1} parent=39 // pred_check
          %p320 = pneg %p85
        $region46: #{tpu_custom_call.1} parent=39 // pred_check_branch
          %322 = sbr.rel (%p320) target = $region48
        $region47: #{tpu_custom_call.1} parent=39 // pred_region
          %324 = dma.done [#allocation6], 16
        $region48: #{tpu_custom_call.1} parent=39 // pred_fallthru
          _
        // Predicated region
        $region49: #{tpu_custom_call.1} parent=39 // pred_check
          %p325 = pneg %p127
        $region50: #{tpu_custom_call.1} parent=39 // pred_check_branch
          %327 = sbr.rel (%p325) target = $region52
        $region51: #{tpu_custom_call.1} parent=39 // pred_region
          %329 = dma.done [#allocation6], 256
        $region52: #{tpu_custom_call.1} parent=39 // pred_fallthru
          _
        %s330 = sand.u32 %s51, 1
        %s331 = scalar_lea.sflag [#allocation3], %s330
        %s332 = sand.u32 %s51, 1
        %s333 = smul.addr %s332, 8
        %s334 = scalar_lea.vmem [#allocation2], %s333
        %p335 = pneg %p64
        %p336 = pneg %p61
        %p337 = pneg %p85
        %p338 = pneg %p82
        %p339 = pneg %p106
        %p340 = pneg %p103
        %p341 = pneg %p127
        %p342 = pneg %p124
        %p343 = pneg %p148
        %p344 = pneg %p145
        %p345 = pneg %p176
        %p346 = pneg %p173
        %s347 = sand.u32 %s163, 1
        %s348 = scalar_lea.sflag [#allocation4], %s347
        %s349 = sand.u32 %s163, 1
        %s350 = smul.addr %s349, 4
        %s351 = scalar_lea.vmem [#allocation8], %s350
        %p352 = pneg %p204
        %p353 = pneg %p201
        %s354 = sand.u32 %s29, 1
        %s355 = scalar_lea.sflag [#allocation10], %s354
        %s356 = sand.u32 %s191, 1
        %s357 = smul.addr %s356, 4
        %s358 = scalar_lea.vmem [#allocation9], %s357
        %p359 = pneg %p232
        %p360 = pneg %p229
        %s361 = sand.u32 %s29, 1
        %s362 = scalar_lea.sflag [#allocation10], %s361
        %s363 = sand.u32 %s219, 1
        %s364 = smul.addr %s363, 4
        %s365 = scalar_lea.vmem [#allocation11], %s364
        %v367 = vld [vmem:[%s314] sm:$0xff]
        %v368 = vld [vmem:[#allocation5] sm:$0x1]
        %v369 = vld [vmem:[%s2] sm:$0x1]
        %vm370 = vcmask 261120
        %v371 = vsel %vm370, %v367, 0.0
        %372 = vadd.xlane.f32.xlu0 %v371
        %v373 = vpop.xlane.xlu0 %372
        %v374 = vrcp.pop 32.0
        %v375 = vmul.f32 32.0, %v374
        %v376 = vsub.f32 1.0, %v375
        %v377 = vmul.f32 %v374, %v376
        %v378 = vadd.f32 %v374, %v377
        %vm379 = vweird.f32 %v374
        %v380 = vsel %vm379, %v374, %v378
        %v381 = vmul.f32 %v373, %v380
        %v382 = vsub.f32 %v367, %v381
        %v383 = vmul.f32 %v382, %v382
        %v384 = vsel %vm370, %v383, 0.0
        %385 = vadd.xlane.f32.xlu0 %v384
        %v386 = vpop.xlane.xlu0 %385
        %v387 = vmul.f32 %v386, %v380
        %v388 = vadd.f32 %v387, 1e-05
        %v389 = vrsqrt.pop %v388
        %v390 = vmul.f32 %v389, %v388
        %v391 = vmul.f32 %v390, %v389
        %v392 = vmul.f32 0.5, %v391
        %v393 = vsub.f32 1.5, %v392
        %v394 = vmul.f32 %v389, %v393
        %vm395 = vweird.f32 %v388
        %vm396 = vweird.f32 %v389
        %vm397 = vmor %vm395, %vm396
        %v398 = vsel %vm397, %v389, %v394
        %v399 = vmul.f32 %v382, %v398
        %v401 = vperm.slane %v368, 0
        %v403 = vmul.f32 %v399, %v401
        %v405 = vperm.slane %v369, 0
        %v407 = vadd.f32 %v403, %v405
        %v408 = vpack.c.bf16 %v407, %v407
        %v409 = vld [vmem:[#allocation7] sm:$0xf]
        %v410 = vld [vmem:[#allocation7 + $0x4] sm:$0xf]
        %v411 = vld [vmem:[#allocation7 + $0x8] sm:$0xf]
        %v412 = vld [vmem:[#allocation7 + $0xc] sm:$0xf]
        %v413 = vld [vmem:[%s4] sm:$0x1]
        %v415 = vperm.slane %v413, 0
        %v421 = vunpack.c.l.b16 %v409
        %v422 = vunpack.c.l.b16 %v410
        %v423 = vunpack.c.l.b16 %v411
        %v424 = vunpack.c.l.b16 %v412
        %v425 = vpack.c.b16 %v422, %v421
        %v426 = vpack.c.b16 %v424, %v423
        %v430 = vsel %vm370, %v408, 0
        %432 = vmatpush.bf16.msra.mxu0 0
        %433 = vmatpush.bf16.msra.mxu0 0
        %434 = vmatpush.bf16.msra.mxu0 0
        %435 = vmatpush.bf16.msra.mxu0 0
        %436 = vmatpush.bf16.msra.mxu0 0
        %437 = vmatpush.bf16.msra.mxu0 0
        %438 = vmatpush.bf16.msra.mxu0 %v426
        %439 = vmatpush.bf16.msra.mxu0 %v425
        %440 = vmatmul.bf16.gmra.mxu0 %v430
        %v441 = vpop.f32.mrf.mxu0
        %v442 = vadd.f32 %v415, %v441
        %v443 = vpop.f32.mrf.mxu0
        %444 = vdwg.mxu0
        %v445 = vmul.f32 %v442, 0.5100697
        %v446 = vpack.c.bf16 %v445, %v445
        %vm447 = vcmask 257024
        %448 = vst.msk [vmem:[%s351] sm:$0xf] %vm447, %v446
        %v449 = vpack.c.bf16 %v442, %v442
        %451 = vrot.lane.b32.xlu0 %v449, 96
        %v452 = vpop.permute.xlu0 %451
        %454 = vst.msk [vmem:[%s358] sm:$0xf] %vm447, %v452
        %455 = vrot.lane.b32.xlu0 %v449, 64
        %v456 = vpop.permute.xlu0 %455
        %458 = vst.msk [vmem:[%s365] sm:$0xf] %vm447, %v456
        %s459 = sand.u32 %s163, 1
        %s460 = scalar_lea.sflag [#allocation4], %s459
        %s461 = sand.u32 %s163, 1
        %s462 = smul.addr %s461, 4
        %s463 = scalar_lea.vmem [#allocation8], %s462
        %s464 = sand.u32 %s29, 1
        %s465 = scalar_lea.sflag [#allocation10], %s464
        %s466 = sand.u32 %s191, 1
        %s467 = smul.addr %s466, 4
        %s468 = scalar_lea.vmem [#allocation9], %s467
        %s469 = sand.u32 %s29, 1
        %s470 = scalar_lea.sflag [#allocation10], %s469
        %s471 = sand.u32 %s219, 1
        %s472 = smul.addr %s471, 4
        %s473 = scalar_lea.vmem [#allocation11], %s472
        // Predicated region
        $region53: #{tpu_custom_call.1} parent=39 // pred_check
          %p474 = pneg %p173
        $region54: #{tpu_custom_call.1} parent=39 // pred_check_branch
          %476 = sbr.rel (%p474) target = $region56
        $region55: #{tpu_custom_call.1} parent=39 // pred_region
          %478 = vsyncadd %s460, 0
          %s479 = sadd.s32 %s34, %s33
          %s480 = smul.addr %s479, 4
          %s481 = scalar_lea.hbm %s5, %s480
          %s483 = sshll.u32 %s463, 4
          %s484 = int_to_ptr.vmem [resolvable:$true] %s483
          %s485 = sshll.u32 %s481, 4
          %s486 = int_to_ptr.hbm [resolvable:$true] %s485
          %488 = dma.vmem_to_hbm [thread:$0]  %s484, 64, %s486, %s460
        $region56: #{tpu_custom_call.1} parent=39 // pred_fallthru
          _
        // Predicated region
        $region57: #{tpu_custom_call.1} parent=39 // pred_check
          %p489 = pneg %p201
        $region58: #{tpu_custom_call.1} parent=39 // pred_check_branch
          %491 = sbr.rel (%p489) target = $region60
        $region59: #{tpu_custom_call.1} parent=39 // pred_region
          %493 = vsyncadd %s465, 0
          %s494 = sadd.s32 %s34, %s33
          %s495 = smul.addr %s494, 4
          %s496 = scalar_lea.hbm %s6, %s495
          %s498 = sshll.u32 %s468, 4
          %s499 = int_to_ptr.vmem [resolvable:$true] %s498
          %s500 = sshll.u32 %s496, 4
          %s501 = int_to_ptr.hbm [resolvable:$true] %s500
          %503 = dma.vmem_to_hbm [thread:$0]  %s499, 64, %s501, %s465
        $region60: #{tpu_custom_call.1} parent=39 // pred_fallthru
          _
        // Predicated region
        $region61: #{tpu_custom_call.1} parent=39 // pred_check
          %p504 = pneg %p229
        $region62: #{tpu_custom_call.1} parent=39 // pred_check_branch
          %506 = sbr.rel (%p504) target = $region64
        $region63: #{tpu_custom_call.1} parent=39 // pred_region
          %508 = vsyncadd %s470, 0
          %s509 = sadd.s32 %s34, %s33
          %s510 = smul.addr %s509, 4
          %s511 = scalar_lea.hbm %s7, %s510
          %s513 = sshll.u32 %s473, 4
          %s514 = int_to_ptr.vmem [resolvable:$true] %s513
          %s515 = sshll.u32 %s511, 4
          %s516 = int_to_ptr.hbm [resolvable:$true] %s515
          %518 = dma.vmem_to_hbm [thread:$0]  %s514, 64, %s516, %s470
        $region64: #{tpu_custom_call.1} parent=39 // pred_fallthru
          _
      $region40: #{tpu_custom_call.1} parent=5 // pred_fallthru
        _
      %p519 = scmp.le.s32.totalorder 2, %s24
      // Predicated region
      $region65: #{tpu_custom_call.1} parent=5 // pred_check
        %p520 = pneg %p519
      $region66: #{tpu_custom_call.1} parent=5 // pred_check_branch
        %522 = sbr.rel (%p520) target = $region68
      $region67: #{tpu_custom_call.1} parent=5 // pred_region
        %s523 = ssub.s32 %s24, 2
        // Predicated region
        $region69: #{tpu_custom_call.1} parent=67 // pred_check
          %p524 = pneg %p179
        $region70: #{tpu_custom_call.1} parent=67 // pred_check_branch
          %526 = sbr.rel (%p524) target = $region72
        $region71: #{tpu_custom_call.1} parent=67 // pred_region
          %s527 = sand.u32 %s164, 1
          %s528 = scalar_lea.sflag [#allocation4], %s527
          %s529 = sand.u32 %s164, 1
          %s530 = smul.addr %s529, 4
          %s531 = scalar_lea.vmem [#allocation8], %s530
          %533 = dma.done %s528, 64
        $region72: #{tpu_custom_call.1} parent=67 // pred_fallthru
          _
        // Predicated region
        $region73: #{tpu_custom_call.1} parent=67 // pred_check
          %p534 = pneg %p207
        $region74: #{tpu_custom_call.1} parent=67 // pred_check_branch
          %536 = sbr.rel (%p534) target = $region76
        $region75: #{tpu_custom_call.1} parent=67 // pred_region
          %s537 = sand.u32 %s30, 1
          %s538 = scalar_lea.sflag [#allocation10], %s537
          %s539 = sand.u32 %s192, 1
          %s540 = smul.addr %s539, 4
          %s541 = scalar_lea.vmem [#allocation9], %s540
          %543 = dma.done %s538, 64
        $region76: #{tpu_custom_call.1} parent=67 // pred_fallthru
          _
        // Predicated region
        $region77: #{tpu_custom_call.1} parent=67 // pred_check
          %p544 = pneg %p235
        $region78: #{tpu_custom_call.1} parent=67 // pred_check_branch
          %546 = sbr.rel (%p544) target = $region80
        $region79: #{tpu_custom_call.1} parent=67 // pred_region
          %s547 = sand.u32 %s30, 1
          %s548 = scalar_lea.sflag [#allocation10], %s547
          %s549 = sand.u32 %s220, 1
          %s550 = smul.addr %s549, 4
          %s551 = scalar_lea.vmem [#allocation11], %s550
          %553 = dma.done %s548, 64
        $region80: #{tpu_custom_call.1} parent=67 // pred_fallthru
          _
      $region68: #{tpu_custom_call.1} parent=5 // pred_fallthru
        _
    $region6: #{tpu_custom_call.1} parent=1 // loop_footer
      %s28 = sadd.s32 1, %s24
    $region7: #{tpu_custom_call.1} parent=1 // loop_footer_branch
      %23 = sbr.rel target = $region3
    $region8: #{tpu_custom_call.1} parent=1 // loop_exit
      _
    %554 = vsyncpa [#allocation3], 1
    %s555 = scalar_lea.sflag [#allocation3], 1
    %556 = vsyncpa %s555, 1
    %557 = vsyncpa [#allocation6], 1
    %558 = vsyncpa [#allocation4], 1
    %s559 = scalar_lea.sflag [#allocation4], 1
    %560 = vsyncpa %s559, 1
    %561 = vsyncpa [#allocation10], 1
    %s562 = scalar_lea.sflag [#allocation10], 1
    %563 = vsyncpa %s562, 1

</llo_original>
